<compile_context>
chip_gen: v7x
topology: tpu7x:2x2x1
jax: 0.10.0
libtpu: 0.0.40
codegen_flags: <defaults>
</compile_context>

<pallas_src>
import functools

import jax
import jax.numpy as jnp
from jax.experimental import pallas as pl
from jax.experimental.pallas import tpu as pltpu

_LANE = 128


def _decomp_kernel(x_ref, res_ref, mean_ref, *, kernel_size):
    # x_ref/res_ref/mean_ref: (TB, L, TF) blocks of the (B, L, F) series.
    TB, L, TF = x_ref.shape
    p = (kernel_size - 1) // 2
    f32 = jnp.float32

    x = x_ref[...].astype(f32)

    # Inclusive prefix sum along the sequence (sublane) axis, Hillis-Steele:
    # ceil(log2 L) shifted adds instead of k separate window adds.
    cs = x
    shift = 1
    while shift < L:
        cs = cs + jnp.concatenate(
            [jnp.zeros((TB, shift, TF), f32), cs[:, : L - shift, :]], axis=1)
        shift *= 2

    # Window sum for output row t (replicate padding of p rows each side):
    #   S[t] = cs[min(t+p, L-1)] - (cs[t-p-1] if t-p-1 >= 0 else 0)
    #          + max(0, p - t) * x[0] + max(0, t - (L-1-p)) * x[L-1]
    n_in = max(L - p, 0)
    hi_parts = []
    if n_in > 0:
        hi_parts.append(cs[:, p:p + n_in, :])
    if L - n_in > 0:
        hi_parts.append(
            jnp.broadcast_to(cs[:, L - 1:L, :], (TB, L - n_in, TF)))
    cs_hi = hi_parts[0] if len(hi_parts) == 1 else jnp.concatenate(
        hi_parts, axis=1)

    n_zero = min(p + 1, L)
    lo_parts = [jnp.zeros((TB, n_zero, TF), f32)]
    if L - n_zero > 0:
        lo_parts.append(cs[:, : L - n_zero, :])
    cs_lo = lo_parts[0] if len(lo_parts) == 1 else jnp.concatenate(
        lo_parts, axis=1)

    s = cs_hi - cs_lo
    if p > 0:
        t_idx = jax.lax.broadcasted_iota(jnp.int32, (TB, L, TF), 1).astype(f32)
        n_front = jnp.maximum(float(p) - t_idx, 0.0)
        n_end = jnp.maximum(t_idx - float(L - 1 - p), 0.0)
        s = s + n_front * x[:, 0:1, :] + n_end * x[:, L - 1:L, :]

    mean = s / float(kernel_size)
    mean_ref[...] = mean.astype(mean_ref.dtype)
    res_ref[...] = (x - mean).astype(res_ref.dtype)


def _plan_tiles(B, L, F, itemsize):
    """Pick (TB, TF) block sizes and a VMEM limit from the chip's capacity."""
    try:
        info = pltpu.get_tpu_info()
        vmem_cap = getattr(info, "vmem_capacity_bytes", 0) or (64 << 20)
    except Exception:  # no TPU info available -> conservative default
        vmem_cap = 64 << 20
    budget = vmem_cap // 3          # per-step resident-set budget
    vmem_limit = (vmem_cap * 3) // 4

    def need(tb, tf):
        # double-buffered input + 2 double-buffered outputs (BlockSpec
        # pipelining) + ~3 live f32 temporaries (prefix sum / shifted / mean).
        return tb * L * tf * (6 * itemsize + 12)

    # Feature tile: lane-dense (multiple of 128) unless F itself is narrower.
    if F <= _LANE:
        tf = F
    else:
        max_tf = ((F + _LANE - 1) // _LANE) * _LANE
        tf = _LANE
        cand = _LANE
        while cand <= max_tf:
            if need(1, cand) <= budget:
                tf = cand
            cand += _LANE
        # TODO(synk): if even a (1, L, 128) block exceeds the budget (very
        # long L), fall back to an L-tiled path with a p-row halo instead of
        # relying on the raised vmem limit.

    # Batch tile: grow until the budget is hit.
    tb = 1
    for cand in range(1, B + 1):
        if need(cand, tf) <= budget:
            tb = cand

    # v7x megacore: keep at least 2 parallel grid steps when the data allows.
    n_b = -(-B // tb)
    n_f = -(-F // tf)
    if n_b * n_f < 2:
        if B >= 2:
            tb = (B + 1) // 2
        elif F > _LANE:
            half = ((tf // 2 + _LANE - 1) // _LANE) * _LANE
            if -(-F // half) >= 2:
                tf = half
    return tb, tf, vmem_limit


def series_decomp(x, kernel_size):
    """x: (B, L, A, C) float array.  Returns (res, moving_mean), same shape."""
    assert kernel_size % 2 == 1, "kernel_size must be odd (as the torch module assumes)"
    B, L, A, C = x.shape
    F = A * C

    x3 = x.reshape(B, L, F)  # trailing-dim merge: free, no HBM traffic
    tb, tf, vmem_limit = _plan_tiles(B, L, F, x.dtype.itemsize)
    grid = (pl.cdiv(B, tb), pl.cdiv(F, tf))

    kernel = functools.partial(_decomp_kernel, kernel_size=kernel_size)

    res, mean = pl.pallas_call(
        kernel,
        out_shape=(
            jax.ShapeDtypeStruct((B, L, F), x.dtype),
            jax.ShapeDtypeStruct((B, L, F), x.dtype),
        ),
        grid_spec=pltpu.PrefetchScalarGridSpec(
            num_scalar_prefetch=0,
            grid=grid,
            in_specs=[
                pl.BlockSpec((tb, L, tf), lambda b, f: (b, 0, f)),
            ],
            out_specs=[
                pl.BlockSpec((tb, L, tf), lambda b, f: (b, 0, f)),
                pl.BlockSpec((tb, L, tf), lambda b, f: (b, 0, f)),
            ],
        ),
        compiler_params=pltpu.CompilerParams(
            dimension_semantics=("parallel", "parallel"),
            vmem_limit_bytes=int(vmem_limit)),
    )(x3)

    return res.reshape(B, L, A, C), mean.reshape(B, L, A, C)


def _reference(x, kernel_size):
    """Pure-JAX reference mirroring the PyTorch module."""
    B, L, A, C = x.shape
    p = (kernel_size - 1) // 2
    front = jnp.broadcast_to(x[:, 0:1], (B, p, A, C))
    end = jnp.broadcast_to(x[:, L - 1:L], (B, p, A, C))
    xp = jnp.concatenate([front, x, end], axis=1)  # (B, L + 2p, A, C)
    mean = jnp.zeros_like(x)
    for w in range(kernel_size):
        mean = mean + xp[:, w:w + L]
    mean = mean / kernel_size
    return x - mean, mean


if __name__ == "__main__":
    key = jax.random.PRNGKey(0)
    B, L, A, C = 2, 16, 4, 32   # F = A*C = 128 -> lane-dense stores
    kernel_size = 5
    x = jax.random.normal(key, (B, L, A, C), dtype=jnp.float32)

    res, mean = series_decomp(x, kernel_size)
    res, mean = jax.block_until_ready((res, mean))

    res_ref, mean_ref = _reference(x, kernel_size)
    assert res.shape == x.shape and mean.shape == x.shape
    assert jnp.allclose(mean, mean_ref, atol=1e-5, rtol=1e-5)
    assert jnp.allclose(res, res_ref, atol=1e-5, rtol=1e-5)

    print("KERNEL_OK")
</pallas_src>

<mosaic_0001>
module attributes {stable_mosaic.version = 11 : i64} {
  func.func @_decomp_kernel(%arg0: i32, %arg1: i32, %arg2: memref<1x16x128xf32, #tpu.memory_space<vmem>>, %arg3: memref<1x16x128xf32, #tpu.memory_space<vmem>>, %arg4: memref<1x16x128xf32, #tpu.memory_space<vmem>>) attributes {dimension_semantics = [#tpu.dimension_semantics<parallel>, #tpu.dimension_semantics<parallel>], iteration_bounds = array<i64: 2, 1>, scalar_prefetch = 0 : i64, scratch_operands = 0 : i64, tpu.core_type = #tpu.core_type<tc>, window_params = [{transform_indices = @transform_0, window_bounds = array<i64: 1, 16, 128>}, {transform_indices = @transform_1, window_bounds = array<i64: 1, 16, 128>}, {transform_indices = @transform_2, window_bounds = array<i64: 1, 16, 128>}]} {
    %c0 = arith.constant 0 : index
    %c0_0 = arith.constant 0 : index
    %c0_1 = arith.constant 0 : index
    %0 = vector.load %arg2[%c0, %c0_0, %c0_1] : memref<1x16x128xf32, #tpu.memory_space<vmem>>, vector<1x16x128xf32>
    %cst = arith.constant 0.000000e+00 : f32
    %1 = vector.broadcast %cst : f32 to vector<1x1x128xf32>
    %2 = vector.extract_strided_slice %0 {offsets = [0, 0, 0], sizes = [1, 15, 128], strides = [1, 1, 1]} : vector<1x16x128xf32> to vector<1x15x128xf32>
    %3 = tpu.concatenate %1, %2 in 1 : vector<1x1x128xf32>, vector<1x15x128xf32> -> vector<1x16x128xf32>
    %4 = arith.addf %0, %3 : vector<1x16x128xf32>
    %cst_2 = arith.constant 0.000000e+00 : f32
    %5 = vector.broadcast %cst_2 : f32 to vector<1x2x128xf32>
    %6 = vector.extract_strided_slice %4 {offsets = [0, 0, 0], sizes = [1, 14, 128], strides = [1, 1, 1]} : vector<1x16x128xf32> to vector<1x14x128xf32>
    %7 = tpu.concatenate %5, %6 in 1 : vector<1x2x128xf32>, vector<1x14x128xf32> -> vector<1x16x128xf32>
    %8 = arith.addf %4, %7 : vector<1x16x128xf32>
    %cst_3 = arith.constant 0.000000e+00 : f32
    %9 = vector.broadcast %cst_3 : f32 to vector<1x4x128xf32>
    %10 = vector.extract_strided_slice %8 {offsets = [0, 0, 0], sizes = [1, 12, 128], strides = [1, 1, 1]} : vector<1x16x128xf32> to vector<1x12x128xf32>
    %11 = tpu.concatenate %9, %10 in 1 : vector<1x4x128xf32>, vector<1x12x128xf32> -> vector<1x16x128xf32>
    %12 = arith.addf %8, %11 : vector<1x16x128xf32>
    %cst_4 = arith.constant 0.000000e+00 : f32
    %13 = vector.broadcast %cst_4 : f32 to vector<1x8x128xf32>
    %14 = vector.extract_strided_slice %12 {offsets = [0, 0, 0], sizes = [1, 8, 128], strides = [1, 1, 1]} : vector<1x16x128xf32> to vector<1x8x128xf32>
    %15 = tpu.concatenate %13, %14 in 1 : vector<1x8x128xf32>, vector<1x8x128xf32> -> vector<1x16x128xf32>
    %16 = arith.addf %12, %15 : vector<1x16x128xf32>
    %17 = vector.extract_strided_slice %16 {offsets = [0, 2, 0], sizes = [1, 14, 128], strides = [1, 1, 1]} : vector<1x16x128xf32> to vector<1x14x128xf32>
    %18 = vector.extract_strided_slice %16 {offsets = [0, 15, 0], sizes = [1, 1, 128], strides = [1, 1, 1]} : vector<1x16x128xf32> to vector<1x1x128xf32>
    %19 = vector.shape_cast %18 : vector<1x1x128xf32> to vector<1x1x128xf32>
    %20 = vector.broadcast %19 : vector<1x1x128xf32> to vector<1x2x128xf32>
    %21 = tpu.concatenate %17, %20 in 1 : vector<1x14x128xf32>, vector<1x2x128xf32> -> vector<1x16x128xf32>
    %cst_5 = arith.constant 0.000000e+00 : f32
    %22 = vector.broadcast %cst_5 : f32 to vector<1x3x128xf32>
    %23 = vector.extract_strided_slice %16 {offsets = [0, 0, 0], sizes = [1, 13, 128], strides = [1, 1, 1]} : vector<1x16x128xf32> to vector<1x13x128xf32>
    %24 = tpu.concatenate %22, %23 in 1 : vector<1x3x128xf32>, vector<1x13x128xf32> -> vector<1x16x128xf32>
    %25 = arith.subf %21, %24 : vector<1x16x128xf32>
    %26 = tpu.iota {dimensions = array<i32: 1>} : vector<1x16x128xi32>
    %27 = arith.sitofp %26 : vector<1x16x128xi32> to vector<1x16x128xf32>
    %cst_6 = arith.constant 2.000000e+00 : f32
    %28 = vector.broadcast %cst_6 : f32 to vector<1x16x128xf32>
    %29 = arith.subf %28, %27 : vector<1x16x128xf32>
    %cst_7 = arith.constant 0.000000e+00 : f32
    %30 = vector.broadcast %cst_7 : f32 to vector<1x16x128xf32>
    %31 = arith.maximumf %29, %30 : vector<1x16x128xf32>
    %cst_8 = arith.constant 1.300000e+01 : f32
    %32 = vector.broadcast %cst_8 : f32 to vector<1x16x128xf32>
    %33 = arith.subf %27, %32 : vector<1x16x128xf32>
    %cst_9 = arith.constant 0.000000e+00 : f32
    %34 = vector.broadcast %cst_9 : f32 to vector<1x16x128xf32>
    %35 = arith.maximumf %33, %34 : vector<1x16x128xf32>
    %36 = vector.extract_strided_slice %0 {offsets = [0, 0, 0], sizes = [1, 1, 128], strides = [1, 1, 1]} : vector<1x16x128xf32> to vector<1x1x128xf32>
    %37 = vector.broadcast %36 : vector<1x1x128xf32> to vector<1x16x128xf32>
    %38 = arith.mulf %31, %37 : vector<1x16x128xf32>
    %39 = arith.addf %25, %38 : vector<1x16x128xf32>
    %40 = vector.extract_strided_slice %0 {offsets = [0, 15, 0], sizes = [1, 1, 128], strides = [1, 1, 1]} : vector<1x16x128xf32> to vector<1x1x128xf32>
    %41 = vector.broadcast %40 : vector<1x1x128xf32> to vector<1x16x128xf32>
    %42 = arith.mulf %35, %41 : vector<1x16x128xf32>
    %43 = arith.addf %39, %42 : vector<1x16x128xf32>
    %cst_10 = arith.constant 5.000000e+00 : f32
    %44 = vector.broadcast %cst_10 : f32 to vector<1x16x128xf32>
    %45 = arith.divf %43, %44 : vector<1x16x128xf32>
    %c0_11 = arith.constant 0 : index
    %c0_12 = arith.constant 0 : index
    %c0_13 = arith.constant 0 : index
    %46 = vector.load %arg4[%c0_11, %c0_12, %c0_13] : memref<1x16x128xf32, #tpu.memory_space<vmem>>, vector<1x16x128xf32>
    tpu.vector_store %arg4[%c0_11, %c0_12, %c0_13], %45 {strides = array<i32>} : memref<1x16x128xf32, #tpu.memory_space<vmem>>, vector<1x16x128xf32>,
    %47 = arith.subf %0, %45 : vector<1x16x128xf32>
    %c0_14 = arith.constant 0 : index
    %c0_15 = arith.constant 0 : index
    %c0_16 = arith.constant 0 : index
    %48 = vector.load %arg3[%c0_14, %c0_15, %c0_16] : memref<1x16x128xf32, #tpu.memory_space<vmem>>, vector<1x16x128xf32>
    tpu.vector_store %arg3[%c0_14, %c0_15, %c0_16], %47 {strides = array<i32>} : memref<1x16x128xf32, #tpu.memory_space<vmem>>, vector<1x16x128xf32>,
    return
  }
  func.func @transform_0(%arg0: i32, %arg1: i32) -> (i32, i32, i32) {
    %c0_i32 = arith.constant 0 : i32
    %c0_i32_0 = arith.constant 0 : i32
    return %arg0, %c0_i32, %arg1 : i32, i32, i32
  }
  func.func @transform_1(%arg0: i32, %arg1: i32) -> (i32, i32, i32) {
    %c0_i32 = arith.constant 0 : i32
    %c0_i32_0 = arith.constant 0 : i32
    return %arg0, %c0_i32, %arg1 : i32, i32, i32
  }
  func.func @transform_2(%arg0: i32, %arg1: i32) -> (i32, i32, i32) {
    %c0_i32 = arith.constant 0 : i32
    %c0_i32_0 = arith.constant 0 : i32
    return %arg0, %c0_i32, %arg1 : i32, i32, i32
  }
}

</mosaic_0001>

<llo_original>
// kernel: tpu_custom_call.1
$region0: #{tpu_custom_call.1}
  #allocation0 [shape = 'u32[]', space=smem, size = 0x4, offset = 0x4, fixed_abs, tag = 'smem constant byte address 0x4 - core index']
  #allocation1 [shape = 'u32[144,128]{1,0:T(1,128)}', space=vmem, size = 0x12000, scoped, tag = 'internal scratch']
  %s0 = inlined_call_operand.hbm [shape: f32[2,16,128], index: 0, kind: input, shape index: {}]
  %s1 = inlined_call_operand.hbm [shape: f32[2,16,128], index: 1, kind: output, shape index: {0}]
  %s2 = inlined_call_operand.hbm [shape: f32[2,16,128], index: 2, kind: output, shape index: {1}]
  %3 = xla_tuple %s1, %s2
  %s4 = sld [smem:[#allocation0]]
  $region49: #{tpu_custom_call.1} parent=0
    _
  %s6 = ssub.s32 1, %s4
  %s7 = scalar_select 0, %s6, %s4
  $region1: #{tpu_custom_call.1} parent=0
    #allocation2 [shape = 'u8[16384]{0}', space=vmem, size = 0x4000, scoped, tag = 'input window, operand 0']
    #allocation3 [shape = 's32[2]{0}', space=sflag, size = 0x8, scoped, tag = 'scoped memory for tpu_custom_call.1']
    #allocation4 [shape = 's32[2]{0}', space=sflag, size = 0x8, scoped, tag = 'scoped memory for tpu_custom_call.1']
    #allocation5 [shape = 'u8[16384]{0}', space=vmem, size = 0x4000, scoped, tag = 'output window, operand 0']
    #allocation6 [shape = 'u8[16384]{0}', space=vmem, size = 0x4000, scoped, tag = 'output window, operand 1']
    #allocation7 [shape = 's32[2]{0}', space=sflag, size = 0x8, scoped, tag = 'scoped memory for tpu_custom_call.1']
    %8 = vsyncpa [#allocation3], 0
    %s9 = scalar_lea.sflag [#allocation3], 1
    %10 = vsyncpa %s9, 0
    %11 = vsyncpa [#allocation4], 0
    %s12 = scalar_lea.sflag [#allocation4], 1
    %13 = vsyncpa %s12, 0
    %14 = vsyncpa [#allocation7], 0
    %s15 = scalar_lea.sflag [#allocation7], 1
    %16 = vsyncpa %s15, 0
    loop: start=0, step=1, limit=4
    $region2: #{tpu_custom_call.1} parent=1 // loop_pre_header
      _
    $region3: #{tpu_custom_call.1} parent=1 // loop_header
      %s18 = sphi 0, %s22
      %p19 = scmp.ge.s32.totalorder %s18, 4
      %s25 = sphi 0, %s37
      %s26 = sphi 0, %s33
      %s27 = sphi 0, %s25
      %s28 = sphi 0, %s26
      %s29 = sphi 0, %s27
      %s30 = sphi 0, %s28
      %s42 = sphi 0, %s44
      %s45 = sphi 0, %s42
      %s46 = sphi 0, %s45
      %s62 = sphi 0, %s46
      %s70 = sphi 0, %s72
      %s73 = sphi 0, %s70
      %s74 = sphi 0, %s73
      %s90 = sphi 0, %s74
      %s98 = sphi 0, %s100
      %s101 = sphi 0, %s98
      %s102 = sphi 0, %s101
      %s118 = sphi 0, %s102
    $region4: #{tpu_custom_call.1} parent=1 // loop_header_branch
      %21 = sbr.rel (%p19) target = $region8
    $region5: #{tpu_custom_call.1} parent=1 // loop_body
      %s23 = ssub.s32 %s18, 1
      %s24 = ssub.s32 %s18, 2
      %s31 = sadd.s32 1, %s26
      %p32 = scmp.ge.s32.totalorder %s31, 1
      %s33 = scalar_select %p32, 0, %s31
      %s34 = sadd.s32 1, %s25
      %s35 = scalar_select %p32, %s34, %s25
      %p36 = scmp.ge.s32.totalorder %s35, 2
      %s37 = scalar_select %p36, 0, %s35
      %s38 = ssub.s32 %s25, %s37
      %s39 = ssub.s32 %s26, %s33
      %s40 = sor.u32 %s38, %s39
      %p41 = scmp.eq.s32.totalorder %s40, 0
      %s43 = sadd.s32 %s42, 1
      %s44 = scalar_select %p41, %s42, %s43
      %p47 = pneg %p41
      %p48 = scmp.eq.s32.totalorder %s18, 1
      %p49 = por %p47, %p48
      %p50 = scmp.ne.s32.totalorder %s42, %s45
      %p51 = scmp.eq.s32.totalorder %s18, 0
      %p52 = por %p50, %p51
      %p53 = scmp.ne.s32.totalorder %s42, %s45
      %p54 = scmp.eq.s32.totalorder %s23, 1
      %p55 = por %p53, %p54
      %p56 = scmp.ne.s32.totalorder %s45, %s46
      %p57 = scmp.eq.s32.totalorder %s23, 0
      %p58 = por %p56, %p57
      %p59 = scmp.ne.s32.totalorder %s45, %s46
      %p60 = scmp.eq.s32.totalorder %s24, 1
      %p61 = por %p59, %p60
      %p63 = scmp.ne.s32.totalorder %s46, %s62
      %p64 = scmp.eq.s32.totalorder %s24, 0
      %p65 = por %p63, %p64
      %s66 = ssub.s32 %s25, %s37
      %s67 = ssub.s32 %s26, %s33
      %s68 = sor.u32 %s66, %s67
      %p69 = scmp.eq.s32.totalorder %s68, 0
      %s71 = sadd.s32 %s70, 1
      %s72 = scalar_select %p69, %s70, %s71
      %p75 = pneg %p69
      %p76 = scmp.eq.s32.totalorder %s18, 1
      %p77 = por %p75, %p76
      %p78 = scmp.ne.s32.totalorder %s70, %s73
      %p79 = scmp.eq.s32.totalorder %s18, 0
      %p80 = por %p78, %p79
      %p81 = scmp.ne.s32.totalorder %s70, %s73
      %p82 = scmp.eq.s32.totalorder %s23, 1
      %p83 = por %p81, %p82
      %p84 = scmp.ne.s32.totalorder %s73, %s74
      %p85 = scmp.eq.s32.totalorder %s23, 0
      %p86 = por %p84, %p85
      %p87 = scmp.ne.s32.totalorder %s73, %s74
      %p88 = scmp.eq.s32.totalorder %s24, 1
      %p89 = por %p87, %p88
      %p91 = scmp.ne.s32.totalorder %s74, %s90
      %p92 = scmp.eq.s32.totalorder %s24, 0
      %p93 = por %p91, %p92
      %s94 = ssub.s32 %s25, %s37
      %s95 = ssub.s32 %s26, %s33
      %s96 = sor.u32 %s94, %s95
      %p97 = scmp.eq.s32.totalorder %s96, 0
      %s99 = sadd.s32 %s98, 1
      %s100 = scalar_select %p97, %s98, %s99
      %p103 = pneg %p97
      %p104 = scmp.eq.s32.totalorder %s18, 1
      %p105 = por %p103, %p104
      %p106 = scmp.ne.s32.totalorder %s98, %s101
      %p107 = scmp.eq.s32.totalorder %s18, 0
      %p108 = por %p106, %p107
      %p109 = scmp.ne.s32.totalorder %s98, %s101
      %p110 = scmp.eq.s32.totalorder %s23, 1
      %p111 = por %p109, %p110
      %p112 = scmp.ne.s32.totalorder %s101, %s102
      %p113 = scmp.eq.s32.totalorder %s23, 0
      %p114 = por %p112, %p113
      %p115 = scmp.ne.s32.totalorder %s101, %s102
      %p116 = scmp.eq.s32.totalorder %s24, 1
      %p117 = por %p115, %p116
      %p119 = scmp.ne.s32.totalorder %s102, %s118
      %p120 = scmp.eq.s32.totalorder %s24, 0
      %p121 = por %p119, %p120
      %p122 = scmp.le.s32.totalorder 1, %s18
      %p123 = scmp.lt.s32.totalorder %s18, 3
      %p124 = pnand %p122, %p123
      %p125 = pneg %p124
      // Predicated region
      $region9: #{tpu_custom_call.1} parent=5 // pred_check
        _
      $region10: #{tpu_custom_call.1} parent=5 // pred_check_branch
        %127 = sbr.rel (%p124) target = $region12
      $region11: #{tpu_custom_call.1} parent=5 // pred_region
        %s128 = ssub.s32 %s18, 1
      $region12: #{tpu_custom_call.1} parent=5 // pred_fallthru
        _
      %p129 = scmp.lt.s32.totalorder %s18, 2
      // Predicated region
      $region13: #{tpu_custom_call.1} parent=5 // pred_check
        %p130 = pneg %p129
      $region14: #{tpu_custom_call.1} parent=5 // pred_check_branch
        %132 = sbr.rel (%p130) target = $region16
      $region15: #{tpu_custom_call.1} parent=5 // pred_region
        // Predicated region
        $region17: #{tpu_custom_call.1} parent=15 // pred_check
          %p133 = pneg %p52
        $region18: #{tpu_custom_call.1} parent=15 // pred_check_branch
          %135 = sbr.rel (%p133) target = $region20
        $region19: #{tpu_custom_call.1} parent=15 // pred_region
          %s136 = sand.u32 %s42, 1
          %s137 = scalar_lea.sflag [#allocation3], %s136
          %s138 = sand.u32 %s42, 1
          %s139 = smul.addr %s138, 16
          %s140 = scalar_lea.vmem [#allocation2], %s139
          %s142 = ssub.s32 256, 256
          %143 = vsyncadd %s137, %s142
          %s144 = smul.addr %s25, 2
          %s145 = sadd.s32 %s26, %s144
          %s146 = smul.addr %s145, 128
          %s147 = scalar_lea.hbm %s0, %s146
          %s148 = sshll.u32 %s140, 4
          %s149 = int_to_ptr.vmem [resolvable:$true] %s148
          %154 = dma.hbm_to_vmem [thread:$0]  %s147, 256, %s149, %s137, 128, 128, 8
        $region20: #{tpu_custom_call.1} parent=15 // pred_fallthru
          _
      $region16: #{tpu_custom_call.1} parent=5 // pred_fallthru
        _
      %p155 = scmp.le.s32.totalorder 1, %s18
      %p156 = scmp.lt.s32.totalorder %s18, 3
      %p157 = pnand %p155, %p156
      %p158 = pneg %p157
      // Predicated region
      $region21: #{tpu_custom_call.1} parent=5 // pred_check
        _
      $region22: #{tpu_custom_call.1} parent=5 // pred_check_branch
        %160 = sbr.rel (%p157) target = $region24
      $region23: #{tpu_custom_call.1} parent=5 // pred_region
        %s161 = ssub.s32 %s18, 1
        %s162 = sand.u32 %s45, 1
        %s163 = scalar_lea.sflag [#allocation3], %s162
        %s164 = sand.u32 %s45, 1
        %s165 = smul.addr %s164, 16
        %s166 = scalar_lea.vmem [#allocation2], %s165
        // Predicated region
        $region25: #{tpu_custom_call.1} parent=23 // pred_check
          %p167 = pneg %p58
        $region26: #{tpu_custom_call.1} parent=23 // pred_check_branch
          %169 = sbr.rel (%p167) target = $region28
        $region27: #{tpu_custom_call.1} parent=23 // pred_region
          %170 = dma.done %s163, 256
        $region28: #{tpu_custom_call.1} parent=23 // pred_fallthru
          _
        %s171 = sand.u32 %s45, 1
        %s172 = scalar_lea.sflag [#allocation3], %s171
        %s173 = sand.u32 %s45, 1
        %s174 = smul.addr %s173, 16
        %s175 = scalar_lea.vmem [#allocation2], %s174
        %p176 = pneg %p58
        %p177 = pneg %p55
        %p178 = pneg %p86
        %p179 = pneg %p83
        %s180 = sand.u32 %s73, 1
        %s181 = scalar_lea.sflag [#allocation4], %s180
        %s182 = sand.u32 %s73, 1
        %s183 = smul.addr %s182, 16
        %s184 = scalar_lea.vmem [#allocation5], %s183
        %p185 = pneg %p114
        %p186 = pneg %p111
        %s187 = sand.u32 %s101, 1
        %s188 = scalar_lea.sflag [#allocation7], %s187
        %s189 = sand.u32 %s101, 1
        %s190 = smul.addr %s189, 16
        %s191 = scalar_lea.vmem [#allocation6], %s190
        %v192 = vld [vmem:[%s166] sm:$0xff]
        %v193 = vld [vmem:[%s166 + $0x8] sm:$0xff]
        %vm196 = vcmask 1040384
        %v197 = vrot.slane %v192, 7
        %v198 = vrot.slane %v193, 7
        %v199 = vsel %vm196, %v197, %v198
        %v202 = vsel %vm196, 0.0, %v197
        %v203 = vadd.f32 %v192, %v202
        %v204 = vadd.f32 %v193, %v199
        %vm207 = vcmask 1041408
        %v208 = vrot.slane %v203, 6
        %v209 = vrot.slane %v204, 6
        %v210 = vsel %vm207, %v208, %v209
        %v213 = vsel %vm207, 0.0, %v208
        %v214 = vadd.f32 %v203, %v213
        %v215 = vadd.f32 %v204, %v210
        %vm218 = vcmask 1043456
        %v219 = vrot.slane %v214, 4
        %v220 = vrot.slane %v215, 4
        %v221 = vsel %vm218, %v219, %v220
        %v224 = vsel %vm218, 0.0, %v219
        %v225 = vadd.f32 %v214, %v224
        %v226 = vadd.f32 %v215, %v221
        %v227 = vadd.f32 %v225, 0.0
        %v228 = vadd.f32 %v226, %v225
        %v229 = vlaneseq
        %v230 = vshrl.u32 %v229, 7
        %v231 = vsub.s32 7, %v230
        %v232 = vrot.slane %v228, %v231
        %vm235 = vcmask 1045504
        %v236 = vrot.slane %v227, 2
        %v237 = vrot.slane %v228, 2
        %v238 = vsel %vm235, %v236, %v237
        %v241 = vsel %vm235, %v237, %v232
        %vm242 = vcmask 1042432
        %v243 = vrot.slane %v227, 5
        %v244 = vrot.slane %v228, 5
        %v245 = vsel %vm242, %v243, %v244
        %v248 = vsel %vm242, 0.0, %v243
        %v249 = vsub.f32 %v238, %v248
        %v250 = vsub.f32 %v241, %v245
        %v251 = vlaneseq
        %v252 = vshrl.u32 %v251, 7
        %v253 = vadd.s32 %v252, 8
        %v254 = vcvt.s32.f32 %v252
        %v255 = vcvt.s32.f32 %v253
        %v256 = vsub.f32 2.0, %v254
        %v257 = vsub.f32 2.0, %v255
        %v258 = vmax.f32 %v256, 0.0
        %v259 = vmax.f32 %v257, 0.0
        %v260 = vsub.f32 %v254, 13.0
        %v261 = vsub.f32 %v255, 13.0
        %v262 = vmax.f32 %v260, 0.0
        %v263 = vmax.f32 %v261, 0.0
        %v264 = vlaneseq
        %v265 = vshrl.u32 %v264, 7
        %v266 = vsub.s32 0, %v265
        %v267 = vrot.slane %v192, %v266
        %v268 = vmul.f32 %v258, %v267
        %v269 = vmul.f32 %v259, %v267
        %v270 = vadd.f32 %v249, %v268
        %v271 = vadd.f32 %v250, %v269
        %v272 = vlaneseq
        %v273 = vshrl.u32 %v272, 7
        %v274 = vsub.s32 7, %v273
        %v275 = vrot.slane %v193, %v274
        %v276 = vmul.f32 %v262, %v275
        %v277 = vmul.f32 %v263, %v275
        %v278 = vadd.f32 %v270, %v276
        %v279 = vadd.f32 %v271, %v277
        %v280 = vrcp.pop 5.0
        %v281 = vmul.f32 %v278, %v280
        %v282 = vmul.f32 %v279, %v280
        %283 = vst [vmem:[%s191] sm:$0xff] %v281
        %284 = vst [vmem:[%s191 + $0x8] sm:$0xff] %v282
        %v285 = vsub.f32 %v192, %v281
        %v286 = vsub.f32 %v193, %v282
        %287 = vst [vmem:[%s184] sm:$0xff] %v285
        %288 = vst [vmem:[%s184 + $0x8] sm:$0xff] %v286
        %s289 = sand.u32 %s73, 1
        %s290 = scalar_lea.sflag [#allocation4], %s289
        %s291 = sand.u32 %s73, 1
        %s292 = smul.addr %s291, 16
        %s293 = scalar_lea.vmem [#allocation5], %s292
        %s294 = sand.u32 %s101, 1
        %s295 = scalar_lea.sflag [#allocation7], %s294
        %s296 = sand.u32 %s101, 1
        %s297 = smul.addr %s296, 16
        %s298 = scalar_lea.vmem [#allocation6], %s297
        // Predicated region
        $region29: #{tpu_custom_call.1} parent=23 // pred_check
          %p299 = pneg %p83
        $region30: #{tpu_custom_call.1} parent=23 // pred_check_branch
          %301 = sbr.rel (%p299) target = $region32
        $region31: #{tpu_custom_call.1} parent=23 // pred_region
          %s303 = ssub.s32 256, 256
          %304 = vsyncadd %s290, %s303
          %s305 = smul.addr %s27, 2
          %s306 = sadd.s32 %s28, %s305
          %s307 = smul.addr %s306, 128
          %s308 = scalar_lea.hbm %s1, %s307
          %s309 = sshll.u32 %s293, 4
          %s310 = int_to_ptr.vmem [resolvable:$true] %s309
          %315 = dma.vmem_to_hbm [thread:$0]  %s310, 256, %s308, %s290, 128, 128, 8
        $region32: #{tpu_custom_call.1} parent=23 // pred_fallthru
          _
        // Predicated region
        $region33: #{tpu_custom_call.1} parent=23 // pred_check
          %p316 = pneg %p111
        $region34: #{tpu_custom_call.1} parent=23 // pred_check_branch
          %318 = sbr.rel (%p316) target = $region36
        $region35: #{tpu_custom_call.1} parent=23 // pred_region
          %s320 = ssub.s32 256, 256
          %321 = vsyncadd %s295, %s320
          %s322 = smul.addr %s27, 2
          %s323 = sadd.s32 %s28, %s322
          %s324 = smul.addr %s323, 128
          %s325 = scalar_lea.hbm %s2, %s324
          %s326 = sshll.u32 %s298, 4
          %s327 = int_to_ptr.vmem [resolvable:$true] %s326
          %332 = dma.vmem_to_hbm [thread:$0]  %s327, 256, %s325, %s295, 128, 128, 8
        $region36: #{tpu_custom_call.1} parent=23 // pred_fallthru
          _
      $region24: #{tpu_custom_call.1} parent=5 // pred_fallthru
        _
      %p333 = scmp.le.s32.totalorder 2, %s18
      // Predicated region
      $region37: #{tpu_custom_call.1} parent=5 // pred_check
        %p334 = pneg %p333
      $region38: #{tpu_custom_call.1} parent=5 // pred_check_branch
        %336 = sbr.rel (%p334) target = $region40
      $region39: #{tpu_custom_call.1} parent=5 // pred_region
        %s337 = ssub.s32 %s18, 2
        // Predicated region
        $region41: #{tpu_custom_call.1} parent=39 // pred_check
          %p338 = pneg %p89
        $region42: #{tpu_custom_call.1} parent=39 // pred_check_branch
          %340 = sbr.rel (%p338) target = $region44
        $region43: #{tpu_custom_call.1} parent=39 // pred_region
          %s341 = sand.u32 %s74, 1
          %s342 = scalar_lea.sflag [#allocation4], %s341
          %s343 = sand.u32 %s74, 1
          %s344 = smul.addr %s343, 16
          %s345 = scalar_lea.vmem [#allocation5], %s344
          %346 = dma.done %s342, 256
        $region44: #{tpu_custom_call.1} parent=39 // pred_fallthru
          _
        // Predicated region
        $region45: #{tpu_custom_call.1} parent=39 // pred_check
          %p347 = pneg %p117
        $region46: #{tpu_custom_call.1} parent=39 // pred_check_branch
          %349 = sbr.rel (%p347) target = $region48
        $region47: #{tpu_custom_call.1} parent=39 // pred_region
          %s350 = sand.u32 %s102, 1
          %s351 = scalar_lea.sflag [#allocation7], %s350
          %s352 = sand.u32 %s102, 1
          %s353 = smul.addr %s352, 16
          %s354 = scalar_lea.vmem [#allocation6], %s353
          %355 = dma.done %s351, 256
        $region48: #{tpu_custom_call.1} parent=39 // pred_fallthru
          _
      $region40: #{tpu_custom_call.1} parent=5 // pred_fallthru
        _
    $region6: #{tpu_custom_call.1} parent=1 // loop_footer
      %s22 = sadd.s32 1, %s18
    $region7: #{tpu_custom_call.1} parent=1 // loop_footer_branch
      %17 = sbr.rel target = $region3
    $region8: #{tpu_custom_call.1} parent=1 // loop_exit
      _
    %356 = vsyncpa [#allocation3], 1
    %s357 = scalar_lea.sflag [#allocation3], 1
    %358 = vsyncpa %s357, 1
    %359 = vsyncpa [#allocation4], 1
    %s360 = scalar_lea.sflag [#allocation4], 1
    %361 = vsyncpa %s360, 1
    %362 = vsyncpa [#allocation7], 1
    %s363 = scalar_lea.sflag [#allocation7], 1
    %364 = vsyncpa %s363, 1

</llo_original>
